<compile_context>
chip_gen: v6e
topology: v6e:2x2x1
jax: 0.10.0
libtpu: 0.0.40
codegen_flags: <defaults>
</compile_context>

<pallas_src>
import jax
import jax.numpy as jnp
from jax import lax
from jax.experimental import pallas as pl
from jax.experimental.pallas import tpu as pltpu


# ----------------------------------------------------------------------------
# Pallas kernel: pure streamed split-K reduction
#   out[s] = sum_k  pre[:, tile(s,k)] @ w_t[:, tile(s,k)].T     (f32 accum)
# Grid axis 0 = split ("parallel"); axis 1 = reduction over the pre-embedding
# feature dimension ("arbitrary", output block resident across it).
# ----------------------------------------------------------------------------
def mmnet_splitk_kernel(pre_ref, w_t_ref, out_ref):
    k = pl.program_id(1)

    # (B, tk) x (n_out_pad, tk) contracting the lane dim -> (B, n_out_pad).
    partial = lax.dot_general(
        pre_ref[...], w_t_ref[...],
        dimension_numbers=(((1,), (1,)), ((), ())),
        preferred_element_type=jnp.float32,
    )

    @pl.when(k == 0)
    def _init():
        out_ref[...] = partial

    @pl.when(k > 0)
    def _accum():
        out_ref[...] += partial


def _choose_tiling(d_pre, *, max_tk=100352, want_split=2):
    """Pick (n_split, tk): tk a multiple of 128 dividing d_pre // n_split.

    Real model: d_pre = 2048*196 = 401408 -> n_split=2, tk=100352
    (2 inner steps per split, 4 grid steps total).
    """
    for n_split in (want_split, 1):
        if d_pre % n_split:
            continue
        per_split = d_pre // n_split
        tk, t = 0, 128
        while t <= min(per_split, max_tk):
            if per_split % t == 0:
                tk = t
            t += 128
        if tk:
            return n_split, tk
    raise ValueError(f"D_pre={d_pre} must be a multiple of 128")


# ----------------------------------------------------------------------------
# One-time (init / load-time) weight layout: (D_pre, n_out) torch-style weight
# -> lane-dense transposed (n_out_pad, D_pre) f32, sublane-padded to 8 rows.
# Done ONCE, not per forward call.
# ----------------------------------------------------------------------------
def prepare_last_layer_weight(w_pre, n_out_pad=8, dtype=jnp.float32):
    d_pre, n_out = w_pre.shape
    assert n_out <= n_out_pad and n_out_pad % 8 == 0
    w_t = jnp.zeros((n_out_pad, d_pre), dtype)
    return w_t.at[:n_out, :].set(w_pre.T.astype(dtype))


def mmnet_last_layer(pre_embeddings, embeddings, w_pre_t, w_au, bias,
                     *, max_tk=100352):
    """Linear([pre_embeddings, (sigmoid(embeddings) > 0.5)]) -> (B, n_out).

    `w_pre_t` must already be laid out as (n_out_pad, D_pre) by
    `prepare_last_layer_weight` (hoisted out of the forward path).
    """
    B, D_pre = pre_embeddings.shape
    D_au, n_out = w_au.shape
    n_out_pad = w_pre_t.shape[0]
    assert w_pre_t.shape == (n_out_pad, D_pre) and n_out <= n_out_pad
    assert embeddings.shape == (B, D_au)

    n_split, tk = _choose_tiling(D_pre, max_tk=max_tk)
    n_inner = (D_pre // n_split) // tk

    feat_map = lambda s, k: (0, s * n_inner + k)

    partials = pl.pallas_call(
        mmnet_splitk_kernel,
        out_shape=jax.ShapeDtypeStruct((n_split, B, n_out_pad), jnp.float32),
        grid_spec=pltpu.PrefetchScalarGridSpec(
            num_scalar_prefetch=0,
            grid=(n_split, n_inner),
            in_specs=[
                pl.BlockSpec((B, tk), feat_map),          # streamed activations (f32)
                pl.BlockSpec((n_out_pad, tk), feat_map),  # streamed weight (lane-dense f32)
            ],
            out_specs=pl.BlockSpec((None, B, n_out_pad), lambda s, k: (s, 0, 0)),
        ),
        compiler_params=pltpu.CompilerParams(
            # On v7x, pltpu.CORE_PARALLEL on axis 0 would pin the split-K axis
            # to the 2 TensorCores; "parallel" is used for portability.
            dimension_semantics=("parallel", "arbitrary"),
            vmem_limit_bytes=32 * 1024 * 1024,
        ),
    )(pre_embeddings, w_pre_t)

    # Tiny AU term in plain JAX:  (sigmoid(emb) > 0.5)  ==  (emb > 0).
    bool_emb = (embeddings > 0).astype(jnp.float32)
    au_term = bool_emb @ w_au.astype(jnp.float32) + bias.astype(jnp.float32)

    return partials.sum(axis=0)[:, :n_out] + au_term


# ----------------------------------------------------------------------------
# Deterministic stand-in for the unspecified pretrained backbone (plain JAX).
# ----------------------------------------------------------------------------
# TODO(synk): the real `pretrained_model` architecture is not given; a
# deterministic linear projection of the flattened NCHW inputs is used instead.
def pretrained_stub(params, onset, x1, x2, x3, x4, if_shuffle):
    del if_shuffle  # shuffling behaviour belongs to the unspecified backbone
    feats = jnp.concatenate(
        [a.reshape(a.shape[0], -1) for a in (onset, x1, x2, x3, x4)], axis=1)
    pre_embeddings = feats @ params["w_backbone_pre"]
    embeddings = feats @ params["w_backbone_au"]
    return pre_embeddings, embeddings


def mmnet_forward(params, onset, x1, x2, x3, x4, if_shuffle):
    pre_embeddings, embeddings = pretrained_stub(
        params, onset, x1, x2, x3, x4, if_shuffle)
    return mmnet_last_layer(
        pre_embeddings, embeddings,
        params["w_last_pre_t"], params["w_last_au"], params["b_last"])


# ----------------------------------------------------------------------------
# Deterministic parameter construction (synthetic; no checkpoint loading).
# The last-layer weight layout is prepared HERE, once, not per forward call.
# ----------------------------------------------------------------------------
def init_params(key, in_feat, d_pre, d_au, n_out=5):
    ks = jax.random.split(key, 4)
    w_last_pre = 0.02 * jax.random.normal(ks[2], (d_pre, n_out), jnp.float32)
    return {
        "w_backbone_pre": 0.02 * jax.random.normal(ks[0], (in_feat, d_pre), jnp.float32),
        "w_backbone_au":  0.02 * jax.random.normal(ks[1], (in_feat, d_au), jnp.float32),
        # last_layer = nn.Linear(d_pre + d_au, 5): pre-embedding block stored
        # pre-laid-out (n_out_pad, d_pre), AU block kept as (d_au, 5).
        "w_last_pre_t":   prepare_last_layer_weight(w_last_pre),
        "w_last_au":      0.02 * jax.random.normal(ks[3], (d_au, n_out), jnp.float32),
        "b_last":         jnp.zeros((n_out,), jnp.float32),
    }


if __name__ == "__main__":
    # Small shapes (real model: d_pre = 2048*196 = 401408, d_au = embedding_au_size).
    B, C, H, W = 2, 4, 16, 16
    D_PRE, D_AU = 256, 32          # embedding_au_size = 32 (synthetic, small)
    N_OUT = 5

    key = jax.random.PRNGKey(0)
    k_in, k_p = jax.random.split(key)
    kin = jax.random.split(k_in, 5)
    onset = jax.random.normal(kin[0], (B, C, H, W), jnp.float32)  # NCHW
    x1 = jax.random.normal(kin[1], (B, C, H, W), jnp.float32)
    x2 = jax.random.normal(kin[2], (B, C, H, W), jnp.float32)
    x3 = jax.random.normal(kin[3], (B, C, H, W), jnp.float32)
    x4 = jax.random.normal(kin[4], (B, C, H, W), jnp.float32)

    params = init_params(k_p, in_feat=5 * C * H * W, d_pre=D_PRE, d_au=D_AU, n_out=N_OUT)

    out = mmnet_forward(params, onset, x1, x2, x3, x4, if_shuffle=False)
    out = jax.block_until_ready(out)

    # Pure-JAX f32 reference (kernel streams f32 now, so compare against f32).
    pre_e, emb_e = pretrained_stub(params, onset, x1, x2, x3, x4, False)
    w_pre_ref = params["w_last_pre_t"][:N_OUT].T                  # (d_pre, 5)
    bool_e = (jax.nn.sigmoid(emb_e) > 0.5).astype(jnp.float32)
    ref = (jnp.dot(pre_e, w_pre_ref, precision=lax.Precision.HIGHEST)
           + bool_e @ params["w_last_au"] + params["b_last"])

    assert out.shape == (B, N_OUT)
    assert jnp.allclose(out, ref, atol=2e-3, rtol=2e-3), \
        float(jnp.max(jnp.abs(out - ref)))

    print("KERNEL_OK")
</pallas_src>

<mosaic_0001>
module attributes {stable_mosaic.version = 11 : i64} {
  func.func @mmnet_splitk_kernel(%arg0: i32, %arg1: i32, %arg2: memref<2x128xf32, #tpu.memory_space<vmem>>, %arg3: memref<8x128xf32, #tpu.memory_space<vmem>>, %arg4: memref<1x2x8xf32, #tpu.memory_space<vmem>>) attributes {dimension_semantics = [#tpu.dimension_semantics<parallel>, #tpu.dimension_semantics<arbitrary>], iteration_bounds = array<i64: 2, 1>, scalar_prefetch = 0 : i64, scratch_operands = 0 : i64, tpu.core_type = #tpu.core_type<tc>, window_params = [{transform_indices = @transform_0, window_bounds = array<i64: 2, 128>}, {transform_indices = @transform_1, window_bounds = array<i64: 8, 128>}, {transform_indices = @transform_2, window_bounds = array<i64: 1, 2, 8>}]} {
    %c0 = arith.constant 0 : index
    %c0_0 = arith.constant 0 : index
    %0 = vector.load %arg2[%c0, %c0_0] : memref<2x128xf32, #tpu.memory_space<vmem>>, vector<2x128xf32>
    %c0_1 = arith.constant 0 : index
    %c0_2 = arith.constant 0 : index
    %1 = vector.load %arg3[%c0_1, %c0_2] : memref<8x128xf32, #tpu.memory_space<vmem>>, vector<8x128xf32>
    %cst = arith.constant dense<0.000000e+00> : vector<2x8xf32>
    %2 = tpu.matmul %0, %1, %cst {dimension_numbers = #tpu.dot_dimension_numbers<[1], [1], [0], [0], [0, 0, 1, 0], [], []>} : vector<2x128xf32>, vector<8x128xf32>, vector<2x8xf32> -> vector<2x8xf32>
    %c0_i32 = arith.constant 0 : i32
    %3 = arith.cmpi eq, %arg1, %c0_i32 : i32
    %4 = arith.extui %3 : i1 to i32
    %c0_i32_3 = arith.constant 0 : i32
    %5 = arith.cmpi ne, %4, %c0_i32_3 : i32
    scf.if %5 {
      %c0_6 = arith.constant 0 : index
      %c0_7 = arith.constant 0 : index
      %c0_8 = arith.constant 0 : index
      %9 = vector.load %arg4[%c0_6, %c0_7, %c0_8] : memref<1x2x8xf32, #tpu.memory_space<vmem>>, vector<1x2x8xf32>
      %10 = vector.shape_cast %9 : vector<1x2x8xf32> to vector<2x8xf32>
      %11 = vector.shape_cast %2 : vector<2x8xf32> to vector<1x2x8xf32>
      tpu.vector_store %arg4[%c0_6, %c0_7, %c0_8], %11 {strides = array<i32>} : memref<1x2x8xf32, #tpu.memory_space<vmem>>, vector<1x2x8xf32>,
    } else {
    }
    %c0_i32_4 = arith.constant 0 : i32
    %6 = arith.cmpi sgt, %arg1, %c0_i32_4 : i32
    %7 = arith.extui %6 : i1 to i32
    %c0_i32_5 = arith.constant 0 : i32
    %8 = arith.cmpi ne, %7, %c0_i32_5 : i32
    scf.if %8 {
      %c0_6 = arith.constant 0 : index
      %c0_7 = arith.constant 0 : index
      %c0_8 = arith.constant 0 : index
      %9 = vector.load %arg4[%c0_6, %c0_7, %c0_8] : memref<1x2x8xf32, #tpu.memory_space<vmem>>, vector<1x2x8xf32>
      %10 = vector.shape_cast %9 : vector<1x2x8xf32> to vector<2x8xf32>
      %11 = arith.addf %10, %2 : vector<2x8xf32>
      %c0_9 = arith.constant 0 : index
      %c0_10 = arith.constant 0 : index
      %c0_11 = arith.constant 0 : index
      %12 = vector.load %arg4[%c0_9, %c0_10, %c0_11] : memref<1x2x8xf32, #tpu.memory_space<vmem>>, vector<1x2x8xf32>
      %13 = vector.shape_cast %12 : vector<1x2x8xf32> to vector<2x8xf32>
      %14 = vector.shape_cast %11 : vector<2x8xf32> to vector<1x2x8xf32>
      tpu.vector_store %arg4[%c0_9, %c0_10, %c0_11], %14 {strides = array<i32>} : memref<1x2x8xf32, #tpu.memory_space<vmem>>, vector<1x2x8xf32>,
    } else {
    }
    return
  }
  func.func @transform_0(%arg0: i32, %arg1: i32) -> (i32, i32) {
    %c1_i32 = arith.constant 1 : i32
    %0 = arith.muli %arg0, %c1_i32 : i32
    %1 = arith.addi %0, %arg1 : i32
    %c0_i32 = arith.constant 0 : i32
    %c0_i32_0 = arith.constant 0 : i32
    return %c0_i32, %1 : i32, i32
  }
  func.func @transform_1(%arg0: i32, %arg1: i32) -> (i32, i32) {
    %c1_i32 = arith.constant 1 : i32
    %0 = arith.muli %arg0, %c1_i32 : i32
    %1 = arith.addi %0, %arg1 : i32
    %c0_i32 = arith.constant 0 : i32
    %c0_i32_0 = arith.constant 0 : i32
    return %c0_i32, %1 : i32, i32
  }
  func.func @transform_2(%arg0: i32, %arg1: i32) -> (i32, i32, i32) {
    %c0_i32 = arith.constant 0 : i32
    %c0_i32_0 = arith.constant 0 : i32
    %c0_i32_1 = arith.constant 0 : i32
    return %arg0, %c0_i32, %c0_i32_0 : i32, i32, i32
  }
}

</mosaic_0001>

<llo_original>
// kernel: tpu_custom_call.1
$region0: #{tpu_custom_call.1}
  #allocation0 [shape = 'u32[]', space=smem, size = 0x4, offset = 0x4, fixed_abs, tag = 'smem constant byte address 0x4 - core index']
  #allocation1 [shape = 'u32[144,128]{1,0:T(1,128)}', space=vmem, size = 0x12000, scoped, tag = 'internal scratch']
  %s0 = inlined_call_operand.hbm [shape: f32[2,256], index: 0, kind: input, shape index: {}]
  %s1 = inlined_call_operand.hbm [shape: f32[8,256], index: 1, kind: input, shape index: {}]
  %s2 = inlined_call_operand.hbm [shape: f32[2,2,8], index: 2, kind: output, shape index: {}]
  %s3 = sld [smem:[#allocation0]]
  $region57: #{tpu_custom_call.1} parent=0
    _
  %s5 = ssub.s32 1, %s3
  %s6 = scalar_select 0, %s5, %s3
  $region1: #{tpu_custom_call.1} parent=0
    #allocation2 [shape = 'u8[2048]{0}', space=vmem, size = 0x800, scoped, tag = 'input window, operand 0']
    #allocation3 [shape = 's32[2]{0}', space=sflag, size = 0x8, scoped, tag = 'scoped memory for tpu_custom_call.1']
    #allocation4 [shape = 's32[2]{0}', space=sflag, size = 0x8, scoped, tag = 'scoped memory for tpu_custom_call.1']
    #allocation5 [shape = 'u8[8192]{0}', space=vmem, size = 0x2000, scoped, tag = 'input window, operand 1']
    #allocation6 [shape = 's32[2]{0}', space=sflag, size = 0x8, scoped, tag = 'scoped memory for tpu_custom_call.1']
    #allocation7 [shape = 'u8[2048]{0}', space=vmem, size = 0x800, scoped, tag = 'output window, operand 0']
    %7 = vsyncpa [#allocation3], 0
    %s8 = scalar_lea.sflag [#allocation3], 1
    %9 = vsyncpa %s8, 0
    %10 = vsyncpa [#allocation6], 0
    %s11 = scalar_lea.sflag [#allocation6], 1
    %12 = vsyncpa %s11, 0
    %13 = vsyncpa [#allocation4], 0
    %s14 = scalar_lea.sflag [#allocation4], 1
    %15 = vsyncpa %s14, 0
    loop: start=0, step=1, limit=4
    $region2: #{tpu_custom_call.1} parent=1 // loop_pre_header
      _
    $region3: #{tpu_custom_call.1} parent=1 // loop_header
      %s17 = sphi 0, %s21
      %p18 = scmp.ge.s32.totalorder %s17, 4
      %s24 = sphi 0, %s36
      %s25 = sphi 0, %s32
      %s26 = sphi 0, %s24
      %s27 = sphi 0, %s25
      %s28 = sphi 0, %s26
      %s29 = sphi 0, %s27
      %s41 = sphi 0, %s43
      %s44 = sphi 0, %s41
      %s45 = sphi 0, %s44
      %s61 = sphi 0, %s45
      %s69 = sphi 0, %s71
      %s72 = sphi 0, %s69
      %s73 = sphi 0, %s72
      %s89 = sphi 0, %s73
      %s95 = sphi 0, %s97
      %s98 = sphi 0, %s95
      %s99 = sphi 0, %s98
      %s115 = sphi 0, %s99
    $region4: #{tpu_custom_call.1} parent=1 // loop_header_branch
      %20 = sbr.rel (%p18) target = $region8
    $region5: #{tpu_custom_call.1} parent=1 // loop_body
      %s22 = ssub.s32 %s17, 1
      %s23 = ssub.s32 %s17, 2
      %s30 = sadd.s32 1, %s25
      %p31 = scmp.ge.s32.totalorder %s30, 1
      %s32 = scalar_select %p31, 0, %s30
      %s33 = sadd.s32 1, %s24
      %s34 = scalar_select %p31, %s33, %s24
      %p35 = scmp.ge.s32.totalorder %s34, 2
      %s36 = scalar_select %p35, 0, %s34
      %s37 = sadd.s32 %s24, %s25
      %s38 = sadd.s32 %s36, %s32
      %s39 = ssub.s32 %s37, %s38
      %p40 = scmp.eq.s32.totalorder %s39, 0
      %s42 = sadd.s32 %s41, 1
      %s43 = scalar_select %p40, %s41, %s42
      %p46 = pneg %p40
      %p47 = scmp.eq.s32.totalorder %s17, 1
      %p48 = por %p46, %p47
      %p49 = scmp.ne.s32.totalorder %s41, %s44
      %p50 = scmp.eq.s32.totalorder %s17, 0
      %p51 = por %p49, %p50
      %p52 = scmp.ne.s32.totalorder %s41, %s44
      %p53 = scmp.eq.s32.totalorder %s22, 1
      %p54 = por %p52, %p53
      %p55 = scmp.ne.s32.totalorder %s44, %s45
      %p56 = scmp.eq.s32.totalorder %s22, 0
      %p57 = por %p55, %p56
      %p58 = scmp.ne.s32.totalorder %s44, %s45
      %p59 = scmp.eq.s32.totalorder %s23, 1
      %p60 = por %p58, %p59
      %p62 = scmp.ne.s32.totalorder %s45, %s61
      %p63 = scmp.eq.s32.totalorder %s23, 0
      %p64 = por %p62, %p63
      %s65 = sadd.s32 %s24, %s25
      %s66 = sadd.s32 %s36, %s32
      %s67 = ssub.s32 %s65, %s66
      %p68 = scmp.eq.s32.totalorder %s67, 0
      %s70 = sadd.s32 %s69, 1
      %s71 = scalar_select %p68, %s69, %s70
      %p74 = pneg %p68
      %p75 = scmp.eq.s32.totalorder %s17, 1
      %p76 = por %p74, %p75
      %p77 = scmp.ne.s32.totalorder %s69, %s72
      %p78 = scmp.eq.s32.totalorder %s17, 0
      %p79 = por %p77, %p78
      %p80 = scmp.ne.s32.totalorder %s69, %s72
      %p81 = scmp.eq.s32.totalorder %s22, 1
      %p82 = por %p80, %p81
      %p83 = scmp.ne.s32.totalorder %s72, %s73
      %p84 = scmp.eq.s32.totalorder %s22, 0
      %p85 = por %p83, %p84
      %p86 = scmp.ne.s32.totalorder %s72, %s73
      %p87 = scmp.eq.s32.totalorder %s23, 1
      %p88 = por %p86, %p87
      %p90 = scmp.ne.s32.totalorder %s73, %s89
      %p91 = scmp.eq.s32.totalorder %s23, 0
      %p92 = por %p90, %p91
      %s93 = ssub.s32 %s24, %s36
      %p94 = scmp.eq.s32.totalorder %s93, 0
      %s96 = sadd.s32 %s95, 1
      %s97 = scalar_select %p94, %s95, %s96
      %p100 = pneg %p94
      %p101 = scmp.eq.s32.totalorder %s17, 1
      %p102 = por %p100, %p101
      %p103 = scmp.ne.s32.totalorder %s95, %s98
      %p104 = scmp.eq.s32.totalorder %s17, 0
      %p105 = por %p103, %p104
      %p106 = scmp.ne.s32.totalorder %s95, %s98
      %p107 = scmp.eq.s32.totalorder %s22, 1
      %p108 = por %p106, %p107
      %p109 = scmp.ne.s32.totalorder %s98, %s99
      %p110 = scmp.eq.s32.totalorder %s22, 0
      %p111 = por %p109, %p110
      %p112 = scmp.ne.s32.totalorder %s98, %s99
      %p113 = scmp.eq.s32.totalorder %s23, 1
      %p114 = por %p112, %p113
      %p116 = scmp.ne.s32.totalorder %s99, %s115
      %p117 = scmp.eq.s32.totalorder %s23, 0
      %p118 = por %p116, %p117
      %p119 = scmp.le.s32.totalorder 1, %s17
      %p120 = scmp.lt.s32.totalorder %s17, 3
      %p121 = pnand %p119, %p120
      %p122 = pneg %p121
      // Predicated region
      $region9: #{tpu_custom_call.1} parent=5 // pred_check
        _
      $region10: #{tpu_custom_call.1} parent=5 // pred_check_branch
        %124 = sbr.rel (%p121) target = $region12
      $region11: #{tpu_custom_call.1} parent=5 // pred_region
        %s125 = ssub.s32 %s17, 1
      $region12: #{tpu_custom_call.1} parent=5 // pred_fallthru
        _
      %p126 = scmp.lt.s32.totalorder %s17, 2
      // Predicated region
      $region13: #{tpu_custom_call.1} parent=5 // pred_check
        %p127 = pneg %p126
      $region14: #{tpu_custom_call.1} parent=5 // pred_check_branch
        %129 = sbr.rel (%p127) target = $region16
      $region15: #{tpu_custom_call.1} parent=5 // pred_region
        // Predicated region
        $region17: #{tpu_custom_call.1} parent=15 // pred_check
          %p130 = pneg %p51
        $region18: #{tpu_custom_call.1} parent=15 // pred_check_branch
          %132 = sbr.rel (%p130) target = $region20
        $region19: #{tpu_custom_call.1} parent=15 // pred_region
          %s133 = sand.u32 %s41, 1
          %s134 = scalar_lea.sflag [#allocation3], %s133
          %s135 = sand.u32 %s41, 1
          %s136 = smul.addr %s135, 2
          %s137 = scalar_lea.vmem [#allocation2], %s136
          %s138 = sadd.s32 %s24, %s25
          %s140 = ssub.s32 32, 32
          %141 = vsyncadd %s134, %s140
          %s142 = smul.addr %s138, 32
          %s143 = scalar_lea.hbm %s0, %s142
          %s145 = sshll.u32 %s137, 4
          %s146 = int_to_ptr.vmem [resolvable:$true] %s145
          %148 = dma.hbm_to_vmem [thread:$0]  %s143, 32, %s146, %s134
        $region20: #{tpu_custom_call.1} parent=15 // pred_fallthru
          _
        // Predicated region
        $region21: #{tpu_custom_call.1} parent=15 // pred_check
          %p149 = pneg %p79
        $region22: #{tpu_custom_call.1} parent=15 // pred_check_branch
          %151 = sbr.rel (%p149) target = $region24
        $region23: #{tpu_custom_call.1} parent=15 // pred_region
          %s152 = sand.u32 %s69, 1
          %s153 = scalar_lea.sflag [#allocation6], %s152
          %s154 = sand.u32 %s69, 1
          %s155 = smul.addr %s154, 8
          %s156 = scalar_lea.vmem [#allocation5], %s155
          %s157 = sadd.s32 %s24, %s25
          %s159 = ssub.s32 128, 128
          %160 = vsyncadd %s153, %s159
          %s161 = smul.addr %s157, 128
          %s162 = scalar_lea.hbm %s1, %s161
          %s164 = sshll.u32 %s156, 4
          %s165 = int_to_ptr.vmem [resolvable:$true] %s164
          %167 = dma.hbm_to_vmem [thread:$0]  %s162, 128, %s165, %s153
        $region24: #{tpu_custom_call.1} parent=15 // pred_fallthru
          _
      $region16: #{tpu_custom_call.1} parent=5 // pred_fallthru
        _
      %p168 = scmp.le.s32.totalorder 1, %s17
      %p169 = scmp.lt.s32.totalorder %s17, 3
      %p170 = pnand %p168, %p169
      %p171 = pneg %p170
      // Predicated region
      $region25: #{tpu_custom_call.1} parent=5 // pred_check
        _
      $region26: #{tpu_custom_call.1} parent=5 // pred_check_branch
        %173 = sbr.rel (%p170) target = $region28
      $region27: #{tpu_custom_call.1} parent=5 // pred_region
        %s174 = ssub.s32 %s17, 1
        %s175 = sand.u32 %s44, 1
        %s176 = scalar_lea.sflag [#allocation3], %s175
        %s177 = sand.u32 %s44, 1
        %s178 = smul.addr %s177, 2
        %s179 = scalar_lea.vmem [#allocation2], %s178
        // Predicated region
        $region29: #{tpu_custom_call.1} parent=27 // pred_check
          %p180 = pneg %p57
        $region30: #{tpu_custom_call.1} parent=27 // pred_check_branch
          %182 = sbr.rel (%p180) target = $region32
        $region31: #{tpu_custom_call.1} parent=27 // pred_region
          %183 = dma.done %s176, 32
        $region32: #{tpu_custom_call.1} parent=27 // pred_fallthru
          _
        %s184 = sand.u32 %s72, 1
        %s185 = scalar_lea.sflag [#allocation6], %s184
        %s186 = sand.u32 %s72, 1
        %s187 = smul.addr %s186, 8
        %s188 = scalar_lea.vmem [#allocation5], %s187
        // Predicated region
        $region33: #{tpu_custom_call.1} parent=27 // pred_check
          %p189 = pneg %p85
        $region34: #{tpu_custom_call.1} parent=27 // pred_check_branch
          %191 = sbr.rel (%p189) target = $region36
        $region35: #{tpu_custom_call.1} parent=27 // pred_region
          %192 = dma.done %s185, 128
        $region36: #{tpu_custom_call.1} parent=27 // pred_fallthru
          _
        %s193 = sand.u32 %s44, 1
        %s194 = scalar_lea.sflag [#allocation3], %s193
        %s195 = sand.u32 %s44, 1
        %s196 = smul.addr %s195, 2
        %s197 = scalar_lea.vmem [#allocation2], %s196
        %p198 = pneg %p57
        %p199 = pneg %p54
        %s200 = sand.u32 %s72, 1
        %s201 = scalar_lea.sflag [#allocation6], %s200
        %s202 = sand.u32 %s72, 1
        %s203 = smul.addr %s202, 8
        %s204 = scalar_lea.vmem [#allocation5], %s203
        %p205 = pneg %p85
        %p206 = pneg %p82
        %p207 = pneg %p111
        %p208 = pneg %p108
        %s209 = sand.u32 %s98, 1
        %s210 = scalar_lea.sflag [#allocation4], %s209
        %s211 = sand.u32 %s98, 1
        %s212 = smul.addr %s211, 2
        %s213 = scalar_lea.vmem [#allocation7], %s212
        %s214 = sadd.s32 %s26, %s27
        %s215 = sadd.s32 %s26, %s27
        %v216 = vld [vmem:[%s179] sm:$0x3]
        %v217 = vld [vmem:[%s188] sm:$0xff]
        %218 = vmatprep.subr.mxu0 0.0
        %219 = vmatpush1.xpose.msra.mxu0 0.0
        %220 = vmatprep.subr.mxu0 0.0
        %221 = vmatpush1.xpose.msra.mxu0 0.0
        %222 = vmatprep.subr.mxu0 0.0
        %223 = vmatpush1.xpose.msra.mxu0 0.0
        %224 = vmatprep.subr.mxu0 0.0
        %225 = vmatpush1.xpose.msra.mxu0 0.0
        %226 = vmatprep.subr.mxu0 0.0
        %227 = vmatpush1.xpose.msra.mxu0 0.0
        %228 = vmatprep.subr.mxu0 0.0
        %229 = vmatpush1.xpose.msra.mxu0 0.0
        %230 = vmatprep.subr.mxu0 0.0
        %231 = vmatpush1.xpose.msra.mxu0 0.0
        %232 = vmatprep.subr.mxu0 0.0
        %233 = vmatpush1.xpose.msra.mxu0 0.0
        %234 = vmatprep.subr.mxu0 0.0
        %235 = vmatpush1.xpose.msra.mxu0 0.0
        %236 = vmatprep.subr.mxu0 0.0
        %237 = vmatpush1.xpose.msra.mxu0 0.0
        %238 = vmatprep.subr.mxu0 0.0
        %239 = vmatpush1.xpose.msra.mxu0 0.0
        %240 = vmatprep.subr.mxu0 0.0
        %241 = vmatpush1.xpose.msra.mxu0 0.0
        %242 = vmatprep.subr.mxu0 0.0
        %243 = vmatpush1.xpose.msra.mxu0 0.0
        %244 = vmatprep.subr.mxu0 0.0
        %245 = vmatpush1.xpose.msra.mxu0 0.0
        %246 = vmatprep.subr.mxu0 0.0
        %247 = vmatpush1.xpose.msra.mxu0 0.0
        %248 = vmatprep.subr.mxu0 0.0
        %249 = vmatpush1.xpose.msra.mxu0 %v217
        %250 = vmatprep.subr.mxu0 0.0
        %251 = vmatpush2.xpose.msra.mxu0 0.0
        %252 = vmatprep.subr.mxu0 0.0
        %253 = vmatpush2.xpose.msra.mxu0 0.0
        %254 = vmatprep.subr.mxu0 0.0
        %255 = vmatpush2.xpose.msra.mxu0 0.0
        %256 = vmatprep.subr.mxu0 0.0
        %257 = vmatpush2.xpose.msra.mxu0 0.0
        %258 = vmatprep.subr.mxu0 0.0
        %259 = vmatpush2.xpose.msra.mxu0 0.0
        %260 = vmatprep.subr.mxu0 0.0
        %261 = vmatpush2.xpose.msra.mxu0 0.0
        %262 = vmatprep.subr.mxu0 0.0
        %263 = vmatpush2.xpose.msra.mxu0 0.0
        %264 = vmatprep.subr.mxu0 0.0
        %265 = vmatpush2.xpose.msra.mxu0 0.0
        %266 = vmatprep.subr.mxu0 0.0
        %267 = vmatpush2.xpose.msra.mxu0 0.0
        %268 = vmatprep.subr.mxu0 0.0
        %269 = vmatpush2.xpose.msra.mxu0 0.0
        %270 = vmatprep.subr.mxu0 0.0
        %271 = vmatpush2.xpose.msra.mxu0 0.0
        %272 = vmatprep.subr.mxu0 0.0
        %273 = vmatpush2.xpose.msra.mxu0 0.0
        %274 = vmatprep.subr.mxu0 0.0
        %275 = vmatpush2.xpose.msra.mxu0 0.0
        %276 = vmatprep.subr.mxu0 0.0
        %277 = vmatpush2.xpose.msra.mxu0 0.0
        %278 = vmatprep.subr.mxu0 0.0
        %279 = vmatpush2.xpose.msra.mxu0 0.0
        %280 = vmatprep.subr.mxu0 0.0
        %281 = vmatpush2.xpose.msra.mxu0 0.0
        %282 = vmatprep.mubr.f32.mxu0 0.0
        %283 = vmatmul.mubr.f32.gmra.mxu0 %v216
        %v284 = vpop.f32.mrf.mxu0
        %v285 = vadd.f32 0.0, %v284
        %v286 = vpop.f32.mrf.mxu0
        %287 = vdwg.mxu0
        %p288 = scmp.eq.s32.totalorder %s27, 0
        // Predicated region
        $region37: #{tpu_custom_call.1} parent=27 // pred_check
          %p289 = pneg %p288
        $region38: #{tpu_custom_call.1} parent=27 // pred_check_branch
          %291 = sbr.rel (%p289) target = $region40
        $region39: #{tpu_custom_call.1} parent=27 // pred_region
          %vm292 = vcmask 58368
          %293 = vst.msk [vmem:[%s213] sm:$0x3] %vm292, %v285
        $region40: #{tpu_custom_call.1} parent=27 // pred_fallthru
          _
        %p294 = scmp.gt.s32.totalorder %s27, 0
        // Predicated region
        $region41: #{tpu_custom_call.1} parent=27 // pred_check
          %p295 = pneg %p294
        $region42: #{tpu_custom_call.1} parent=27 // pred_check_branch
          %297 = sbr.rel (%p295) target = $region44
        $region43: #{tpu_custom_call.1} parent=27 // pred_region
          %v298 = vld [vmem:[%s213] sm:$0x3]
          %v299 = vadd.f32 %v298, %v285
          %vm300 = vcmask 58368
          %301 = vst.msk [vmem:[%s213] sm:$0x3] %vm300, %v299
        $region44: #{tpu_custom_call.1} parent=27 // pred_fallthru
          _
        %s302 = sand.u32 %s98, 1
        %s303 = scalar_lea.sflag [#allocation4], %s302
        %s304 = sand.u32 %s98, 1
        %s305 = smul.addr %s304, 2
        %s306 = scalar_lea.vmem [#allocation7], %s305
        // Predicated region
        $region45: #{tpu_custom_call.1} parent=27 // pred_check
          %p307 = pneg %p108
        $region46: #{tpu_custom_call.1} parent=27 // pred_check_branch
          %309 = sbr.rel (%p307) target = $region48
        $region47: #{tpu_custom_call.1} parent=27 // pred_region
          %s311 = ssub.s32 32, 32
          %312 = vsyncadd %s303, %s311
          %s313 = smul.addr %s26, 32
          %s314 = scalar_lea.hbm %s2, %s313
          %s316 = sshll.u32 %s306, 4
          %s317 = int_to_ptr.vmem [resolvable:$true] %s316
          %319 = dma.vmem_to_hbm [thread:$0]  %s317, 32, %s314, %s303
        $region48: #{tpu_custom_call.1} parent=27 // pred_fallthru
          _
      $region28: #{tpu_custom_call.1} parent=5 // pred_fallthru
        _
      %p320 = scmp.le.s32.totalorder 2, %s17
      // Predicated region
      $region49: #{tpu_custom_call.1} parent=5 // pred_check
        %p321 = pneg %p320
      $region50: #{tpu_custom_call.1} parent=5 // pred_check_branch
        %323 = sbr.rel (%p321) target = $region52
      $region51: #{tpu_custom_call.1} parent=5 // pred_region
        %s324 = ssub.s32 %s17, 2
        // Predicated region
        $region53: #{tpu_custom_call.1} parent=51 // pred_check
          %p325 = pneg %p114
        $region54: #{tpu_custom_call.1} parent=51 // pred_check_branch
          %327 = sbr.rel (%p325) target = $region56
        $region55: #{tpu_custom_call.1} parent=51 // pred_region
          %s328 = sand.u32 %s99, 1
          %s329 = scalar_lea.sflag [#allocation4], %s328
          %s330 = sand.u32 %s99, 1
          %s331 = smul.addr %s330, 2
          %s332 = scalar_lea.vmem [#allocation7], %s331
          %333 = dma.done %s329, 32
        $region56: #{tpu_custom_call.1} parent=51 // pred_fallthru
          _
      $region52: #{tpu_custom_call.1} parent=5 // pred_fallthru
        _
    $region6: #{tpu_custom_call.1} parent=1 // loop_footer
      %s21 = sadd.s32 1, %s17
    $region7: #{tpu_custom_call.1} parent=1 // loop_footer_branch
      %16 = sbr.rel target = $region3
    $region8: #{tpu_custom_call.1} parent=1 // loop_exit
      _
    %334 = vsyncpa [#allocation3], 1
    %s335 = scalar_lea.sflag [#allocation3], 1
    %336 = vsyncpa %s335, 1
    %337 = vsyncpa [#allocation6], 1
    %s338 = scalar_lea.sflag [#allocation6], 1
    %339 = vsyncpa %s338, 1
    %340 = vsyncpa [#allocation4], 1
    %s341 = scalar_lea.sflag [#allocation4], 1
    %342 = vsyncpa %s341, 1

</llo_original>
